<compile_context>
chip_gen: v5e
topology: v5e:2x2
jax: 0.10.0
libtpu: 0.0.40
codegen_flags: <defaults>
</compile_context>

<pallas_src>
import math

import jax
import jax.numpy as jnp
from jax.experimental import pallas as pl
from jax.experimental.pallas import tpu as pltpu

LANE = 128                              # TPU lane width
VMEM_SAFE_BUDGET = 48 * 1024 * 1024     # headroom under v7x's 64 MiB physical VMEM


def _round_up(x, m):
    return ((x + m - 1) // m) * m


# ----------------------------- Pallas kernel --------------------------------

def _linear_kernel(x_ref, w_ref, o_ref):
    # x_ref: (TILE_N, DIM_IN) node features (f32, cast to the weight dtype here
    #        on the VPU so the wrapper never materializes a casted copy in HBM),
    # w_ref: (DIM_IN, COL_TILE) bf16 block-diagonal weight,
    # o_ref: (TILE_N, COL_TILE) output (bf16 by default), f32 MXU accumulation.
    x = x_ref[...].astype(w_ref.dtype)
    o_ref[...] = jnp.dot(
        x, w_ref[...], preferred_element_type=jnp.float32
    ).astype(o_ref.dtype)


def stride_linear_pallas(x, w_big, *, tile_n=512, out_dtype=jnp.bfloat16):
    """out = x @ w_big (block-diagonal equivariant linear as one dense matmul).

    x:     (N, dim_in) node features (any float dtype; left untouched in HBM)
    w_big: (dim_in, dim_out) block-diagonal weight already in the compute dtype
           (bf16 recommended; built once by build_block_diag_weight)

    No padding / casting / slicing copies in the wrapper:
      - ragged pl.cdiv grid over N (OOB rows of the last tile are never written),
      - dim_in / dim_out kept at natural sizes (full minor-dim blocks),
      - kernel emits the final (N, dim_out) layout directly, bf16 by default.
    Use out_dtype=jnp.float32 (and an f32 w_big) for strict parity with the
    PyTorch f32 module.
    """
    n, dim_in = x.shape
    dim_in_w, dim_out = w_big.shape
    assert dim_in == dim_in_w, "x / w_big dim mismatch"
    if n == 0:  # empty graph guard
        return jnp.zeros((0, dim_out), dtype=out_dtype)

    x_isz = jnp.dtype(x.dtype).itemsize
    w_isz = jnp.dtype(w_big.dtype).itemsize
    o_isz = jnp.dtype(out_dtype).itemsize

    # Node tile: large & 128-aligned (amortizes ~0.35us/grid-step overhead and
    # keeps MXU M-dim full on v6e/v7x), never blown up past round_up(n, 128),
    # and shrunk before the per-step working set exceeds the v7x-safe budget.
    tile = max(LANE, min(_round_up(tile_n, LANE), _round_up(n, LANE)))

    def _working_set(t):
        # double-buffered x and out tiles + (double-buffered) resident W
        return 2 * (t * dim_in * x_isz + t * dim_out * o_isz
                    + dim_in * dim_out * w_isz)

    while tile > LANE and _working_set(tile) > VMEM_SAFE_BUDGET:
        tile -= LANE

    grid_n = pl.cdiv(n, tile)

    # v7x has 2 TensorCores: a single node tile would leave one idle, so split
    # dim_out into >=2 column blocks in that case (zero cost when grid_n >= 2,
    # where the full-width W stays VMEM-resident across node tiles).
    if grid_n == 1 and dim_out > LANE:
        col_tile = _round_up(-(-dim_out // 2), LANE)   # ~2 balanced column blocks
    else:
        col_tile = dim_out
    grid_c = pl.cdiv(dim_out, col_tile)

    vmem_limit = max(32 * 1024 * 1024, _working_set(tile) + 8 * 1024 * 1024)

    flops = 2 * n * dim_in * dim_out
    w_fetches = 1 if grid_c == 1 else grid_n * grid_c
    bytes_accessed = (n * dim_in * x_isz
                      + w_fetches * dim_in * dim_out * w_isz
                      + n * dim_out * o_isz)

    # TODO(synk): for production sevenn channel counts, exploit the block-diagonal
    # structure (grid axis over irrep blocks via scalar-prefetched offsets) instead
    # of the dense kron'd W_big; the dense form is fine at this 72->144 scale.
    return pl.pallas_call(
        _linear_kernel,
        out_shape=jax.ShapeDtypeStruct((n, dim_out), out_dtype),
        grid_spec=pl.GridSpec(
            grid=(grid_n, grid_c),
            in_specs=[
                pl.BlockSpec((tile, dim_in), lambda i, j: (i, 0)),
                # Constant row index; with grid_c == 1 the whole W is DMA'd once
                # and stays resident across node tiles.
                # TODO(synk): pipeline_mode=pl.Buffered(1) here would drop the
                # second W buffer on v7x; left at the default for portability
                # (W is tiny at demo scale).
                pl.BlockSpec((dim_in, col_tile), lambda i, j: (0, j)),
            ],
            out_specs=pl.BlockSpec((tile, col_tile), lambda i, j: (i, j)),
        ),
        compiler_params=pltpu.CompilerParams(
            # Independent output tiles -> shard across TensorCores (v7x megacore).
            dimension_semantics=("parallel", "parallel"),
            vmem_limit_bytes=vmem_limit,
        ),
        cost_estimate=pl.CostEstimate(
            flops=flops, transcendentals=0, bytes_accessed=bytes_accessed
        ),
    )(x, w_big)


# ----------------------------- parameter glue --------------------------------

def build_block_diag_weight(irreps_in, irreps_out, key, *,
                            compute_dtype=jnp.bfloat16):
    """irreps_*: list of (mul, l).  Returns (per-l f32 weights, dense W_big).

    W_big is built ONCE and returned already in the kernel's compute dtype
    (bf16 by default), so the forward path never re-casts / re-pads it.
    W_big[dim_in, dim_out] = blockdiag_l kron(W_l/sqrt(mul_in_l), I_{2l+1}) for
    the mul-major (mul, 2l+1) strided layout.
    """
    assert [l for _, l in irreps_in] == [l for _, l in irreps_out], \
        "IrrepsStrideLinear requires identical irrep types (same l list, same order)"

    dim_in = sum(m * (2 * l + 1) for m, l in irreps_in)
    dim_out = sum(m * (2 * l + 1) for m, l in irreps_out)

    weights = []
    w_big = jnp.zeros((dim_in, dim_out), dtype=jnp.float32)
    off_in, off_out = 0, 0
    for (mul_in, l), (mul_out, _) in zip(irreps_in, irreps_out):
        key, sub = jax.random.split(key)
        w_l = jax.random.normal(sub, (mul_in, mul_out), dtype=jnp.float32)  # e3nn init ~ N(0,1)
        weights.append(w_l)
        ir_dim = 2 * l + 1
        block = jnp.kron(w_l / math.sqrt(mul_in), jnp.eye(ir_dim, dtype=jnp.float32))
        w_big = w_big.at[off_in:off_in + mul_in * ir_dim,
                         off_out:off_out + mul_out * ir_dim].set(block)
        off_in += mul_in * ir_dim
        off_out += mul_out * ir_dim
    return weights, w_big.astype(compute_dtype)


def reference_forward(x, irreps_in, irreps_out, weights, *, quantize=True):
    """Pure-JAX per-irrep reference (mul_ir layout).

    quantize=True applies the same bf16 operand rounding as the kernel path
    (accumulation in f32) so the comparison can stay tight.
    """
    xr = x.astype(jnp.bfloat16).astype(jnp.float32) if quantize else x
    outs = []
    off_in = 0
    for (mul_in, l), (mul_out, _), w_l in zip(irreps_in, irreps_out, weights):
        ir_dim = 2 * l + 1
        w_scaled = w_l / math.sqrt(mul_in)
        if quantize:
            w_scaled = w_scaled.astype(jnp.bfloat16).astype(jnp.float32)
        blk = xr[:, off_in:off_in + mul_in * ir_dim].reshape(-1, mul_in, ir_dim)
        out = jnp.einsum("nui,uv->nvi", blk, w_scaled)
        outs.append(out.reshape(-1, mul_out * ir_dim))
        off_in += mul_in * ir_dim
    return jnp.concatenate(outs, axis=-1)


# --------------------------------- main ---------------------------------------

if __name__ == "__main__":
    # irreps_x   = 8x0e + 8x1o + 8x2e    -> dim_in  = 8 + 24 + 40 = 72
    # irreps_out = 16x0e + 16x1o + 16x2e -> dim_out = 16 + 48 + 80 = 144
    # TODO(synk): AtomGraphData dict plumbing (data[KEY.NODE_FEATURE] ->
    #             data[KEY.SELF_CONNECTION_TEMP]) is Python bookkeeping, elided.
    irreps_x = [(8, 0), (8, 1), (8, 2)]
    irreps_out = [(16, 0), (16, 1), (16, 2)]
    n_nodes = 37  # NOT a multiple of any tile: exercises the ragged grid and the
                  # grid_n==1 -> 2-way dim_out split (both v7x TCs busy)

    key = jax.random.PRNGKey(0)
    key_x, key_w = jax.random.split(key)

    dim_in = sum(m * (2 * l + 1) for m, l in irreps_x)
    dim_out = sum(m * (2 * l + 1) for m, l in irreps_out)
    x = jax.random.normal(key_x, (n_nodes, dim_in), dtype=jnp.float32)

    # Weight built (and cast to bf16) once, outside the forward hot path.
    weights, w_big = build_block_diag_weight(irreps_x, irreps_out, key_w)

    # data[KEY.SELF_CONNECTION_TEMP] = linear(data[KEY.NODE_FEATURE])
    out = stride_linear_pallas(x, w_big, tile_n=512)
    out = jax.block_until_ready(out)

    assert out.shape == (n_nodes, dim_out)
    assert out.dtype == jnp.bfloat16
    out_f32 = out.astype(jnp.float32)

    # Tight check vs a reference with the same bf16 operand rounding (both sides
    # accumulate in f32; tolerance absorbs the bf16 output rounding).
    ref_q = reference_forward(x, irreps_x, irreps_out, weights, quantize=True)
    assert jnp.allclose(out_f32, ref_q, atol=2e-2, rtol=2e-2), \
        "mismatch vs. quantized reference"

    # Loose check vs the full-f32 reference (bf16 operand + output rounding only).
    ref_f32 = reference_forward(x, irreps_x, irreps_out, weights, quantize=False)
    assert jnp.allclose(out_f32, ref_f32, atol=8e-2, rtol=8e-2), \
        "mismatch vs. f32 reference"

    # Empty-graph guard (previously crashed on n == 0).
    empty = stride_linear_pallas(jnp.zeros((0, dim_in), jnp.float32), w_big)
    assert jax.block_until_ready(empty).shape == (0, dim_out)

    print("KERNEL_OK")
</pallas_src>

<mosaic_0001>
module attributes {stable_mosaic.version = 11 : i64} {
  func.func @_linear_kernel(%arg0: i32, %arg1: i32, %arg2: memref<128x72xf32, #tpu.memory_space<vmem>>, %arg3: memref<72x128xbf16, #tpu.memory_space<vmem>>, %arg4: memref<128x128xbf16, #tpu.memory_space<vmem>>) attributes {dimension_semantics = [#tpu.dimension_semantics<parallel>, #tpu.dimension_semantics<parallel>], iteration_bounds = array<i64: 1, 2>, scalar_prefetch = 0 : i64, scratch_operands = 0 : i64, tpu.core_type = #tpu.core_type<tc>, window_params = [{transform_indices = @transform_0, window_bounds = array<i64: 128, 72>}, {transform_indices = @transform_1, window_bounds = array<i64: 72, 128>}, {transform_indices = @transform_2, window_bounds = array<i64: 128, 128>}]} {
    %c0 = arith.constant 0 : index
    %c0_0 = arith.constant 0 : index
    %0 = vector.load %arg2[%c0, %c0_0] : memref<128x72xf32, #tpu.memory_space<vmem>>, vector<128x72xf32>
    %1 = arith.truncf %0 : vector<128x72xf32> to vector<128x72xbf16>
    %c0_1 = arith.constant 0 : index
    %c0_2 = arith.constant 0 : index
    %2 = vector.load %arg3[%c0_1, %c0_2] : memref<72x128xbf16, #tpu.memory_space<vmem>>, vector<72x128xbf16>
    %cst = arith.constant dense<0.000000e+00> : vector<128x128xf32>
    %3 = tpu.matmul %1, %2, %cst {dimension_numbers = #tpu.dot_dimension_numbers<[1], [0], [0], [1], [0, 0, 1, 1], [], []>} : vector<128x72xbf16>, vector<72x128xbf16>, vector<128x128xf32> -> vector<128x128xf32>
    %4 = arith.truncf %3 : vector<128x128xf32> to vector<128x128xbf16>
    %c0_3 = arith.constant 0 : index
    %c0_4 = arith.constant 0 : index
    %5 = vector.load %arg4[%c0_3, %c0_4] : memref<128x128xbf16, #tpu.memory_space<vmem>>, vector<128x128xbf16>
    tpu.vector_store %arg4[%c0_3, %c0_4], %4 {strides = array<i32>} : memref<128x128xbf16, #tpu.memory_space<vmem>>, vector<128x128xbf16>,
    return
  }
  func.func @transform_0(%arg0: i32, %arg1: i32) -> (i32, i32) {
    %c0_i32 = arith.constant 0 : i32
    %c0_i32_0 = arith.constant 0 : i32
    return %arg0, %c0_i32 : i32, i32
  }
  func.func @transform_1(%arg0: i32, %arg1: i32) -> (i32, i32) {
    %c0_i32 = arith.constant 0 : i32
    %c0_i32_0 = arith.constant 0 : i32
    return %c0_i32, %arg1 : i32, i32
  }
  func.func @transform_2(%arg0: i32, %arg1: i32) -> (i32, i32) {
    %c0_i32 = arith.constant 0 : i32
    return %arg0, %arg1 : i32, i32
  }
}

</mosaic_0001>

<llo_original>
// kernel: tpu_custom_call.1
$region0: #{tpu_custom_call.1}
  #allocation0 [shape = 'u32[]', space=smem, size = 0x4, offset = 0x4, fixed_abs, tag = 'smem constant byte address 0x4 - core index']
  #allocation1 [shape = 'u32[72,128]{1,0:T(1,128)}', space=vmem, size = 0x9000, scoped, tag = 'internal scratch']
  %s0 = inlined_call_operand.hbm [shape: f32[37,72], index: 0, kind: input, shape index: {}]
  %s1 = inlined_call_operand.hbm [shape: bf16[72,144], index: 1, kind: input, shape index: {}]
  %s2 = inlined_call_operand.hbm [shape: bf16[37,144], index: 2, kind: output, shape index: {}]
  %s3 = sld [smem:[#allocation0]]
  $region49: #{tpu_custom_call.1} parent=0
    _
  %s5 = ssub.s32 1, %s3
  %s6 = scalar_select 0, %s5, %s3
  $region1: #{tpu_custom_call.1} parent=0
    #allocation2 [shape = 'u8[65536]{0}', space=vmem, size = 0x10000, scoped, tag = 'input window, operand 0, single buffered']
    #allocation3 [shape = 's32[2]{0}', space=sflag, size = 0x8, scoped, tag = 'scoped memory for tpu_custom_call.1']
    #allocation4 [shape = 's32[2]{0}', space=sflag, size = 0x8, scoped, tag = 'scoped memory for tpu_custom_call.1']
    #allocation5 [shape = 'u8[36864]{0}', space=vmem, size = 0x9000, scoped, tag = 'input window, operand 1']
    #allocation6 [shape = 's32[2]{0}', space=sflag, size = 0x8, scoped, tag = 'scoped memory for tpu_custom_call.1']
    #allocation7 [shape = 'u8[65536]{0}', space=vmem, size = 0x10000, scoped, tag = 'output window, operand 0']
    %7 = vsyncpa [#allocation3], 0
    %8 = vsyncpa [#allocation6], 0
    %s9 = scalar_lea.sflag [#allocation6], 1
    %10 = vsyncpa %s9, 0
    %11 = vsyncpa [#allocation4], 0
    %s12 = scalar_lea.sflag [#allocation4], 1
    %13 = vsyncpa %s12, 0
    loop: start=0, step=1, limit=4
    $region2: #{tpu_custom_call.1} parent=1 // loop_pre_header
      _
    $region3: #{tpu_custom_call.1} parent=1 // loop_header
      %s15 = sphi 0, %s19
      %p16 = scmp.ge.s32.totalorder %s15, 4
      %s22 = sphi 0, %s34
      %s23 = sphi 0, %s30
      %s24 = sphi 0, %s22
      %s25 = sphi 0, %s23
      %s26 = sphi 0, %s24
      %s27 = sphi 0, %s25
      %s37 = sphi 0, %s39
      %s40 = sphi 0, %s37
      %s41 = sphi 0, %s40
      %s57 = sphi 0, %s41
      %s63 = sphi 0, %s65
      %s66 = sphi 0, %s63
      %s67 = sphi 0, %s66
      %s83 = sphi 0, %s67
      %s91 = sphi 0, %s93
      %s94 = sphi 0, %s91
      %s95 = sphi 0, %s94
      %s111 = sphi 0, %s95
    $region4: #{tpu_custom_call.1} parent=1 // loop_header_branch
      %18 = sbr.rel (%p16) target = $region8
    $region5: #{tpu_custom_call.1} parent=1 // loop_body
      %s20 = ssub.s32 %s15, 1
      %s21 = ssub.s32 %s15, 2
      %s28 = sadd.s32 1, %s23
      %p29 = scmp.ge.s32.totalorder %s28, 2
      %s30 = scalar_select %p29, 0, %s28
      %s31 = sadd.s32 1, %s22
      %s32 = scalar_select %p29, %s31, %s22
      %p33 = scmp.ge.s32.totalorder %s32, 1
      %s34 = scalar_select %p33, 0, %s32
      %s35 = ssub.s32 %s22, %s34
      %p36 = scmp.eq.s32.totalorder %s35, 0
      %s38 = sadd.s32 %s37, 1
      %s39 = scalar_select %p36, %s37, %s38
      %p42 = pneg %p36
      %p43 = scmp.eq.s32.totalorder %s15, 1
      %p44 = por %p42, %p43
      %p45 = scmp.ne.s32.totalorder %s37, %s40
      %p46 = scmp.eq.s32.totalorder %s15, 0
      %p47 = por %p45, %p46
      %p48 = scmp.ne.s32.totalorder %s37, %s40
      %p49 = scmp.eq.s32.totalorder %s20, 1
      %p50 = por %p48, %p49
      %p51 = scmp.ne.s32.totalorder %s40, %s41
      %p52 = scmp.eq.s32.totalorder %s20, 0
      %p53 = por %p51, %p52
      %p54 = scmp.ne.s32.totalorder %s40, %s41
      %p55 = scmp.eq.s32.totalorder %s21, 1
      %p56 = por %p54, %p55
      %p58 = scmp.ne.s32.totalorder %s41, %s57
      %p59 = scmp.eq.s32.totalorder %s21, 0
      %p60 = por %p58, %p59
      %s61 = ssub.s32 %s23, %s30
      %p62 = scmp.eq.s32.totalorder %s61, 0
      %s64 = sadd.s32 %s63, 1
      %s65 = scalar_select %p62, %s63, %s64
      %p68 = pneg %p62
      %p69 = scmp.eq.s32.totalorder %s15, 1
      %p70 = por %p68, %p69
      %p71 = scmp.ne.s32.totalorder %s63, %s66
      %p72 = scmp.eq.s32.totalorder %s15, 0
      %p73 = por %p71, %p72
      %p74 = scmp.ne.s32.totalorder %s63, %s66
      %p75 = scmp.eq.s32.totalorder %s20, 1
      %p76 = por %p74, %p75
      %p77 = scmp.ne.s32.totalorder %s66, %s67
      %p78 = scmp.eq.s32.totalorder %s20, 0
      %p79 = por %p77, %p78
      %p80 = scmp.ne.s32.totalorder %s66, %s67
      %p81 = scmp.eq.s32.totalorder %s21, 1
      %p82 = por %p80, %p81
      %p84 = scmp.ne.s32.totalorder %s67, %s83
      %p85 = scmp.eq.s32.totalorder %s21, 0
      %p86 = por %p84, %p85
      %s87 = ssub.s32 %s22, %s34
      %s88 = ssub.s32 %s23, %s30
      %s89 = sor.u32 %s87, %s88
      %p90 = scmp.eq.s32.totalorder %s89, 0
      %s92 = sadd.s32 %s91, 1
      %s93 = scalar_select %p90, %s91, %s92
      %p96 = pneg %p90
      %p97 = scmp.eq.s32.totalorder %s15, 1
      %p98 = por %p96, %p97
      %p99 = scmp.ne.s32.totalorder %s91, %s94
      %p100 = scmp.eq.s32.totalorder %s15, 0
      %p101 = por %p99, %p100
      %p102 = scmp.ne.s32.totalorder %s91, %s94
      %p103 = scmp.eq.s32.totalorder %s20, 1
      %p104 = por %p102, %p103
      %p105 = scmp.ne.s32.totalorder %s94, %s95
      %p106 = scmp.eq.s32.totalorder %s20, 0
      %p107 = por %p105, %p106
      %p108 = scmp.ne.s32.totalorder %s94, %s95
      %p109 = scmp.eq.s32.totalorder %s21, 1
      %p110 = por %p108, %p109
      %p112 = scmp.ne.s32.totalorder %s95, %s111
      %p113 = scmp.eq.s32.totalorder %s21, 0
      %p114 = por %p112, %p113
      %p115 = scmp.le.s32.totalorder 1, %s15
      %p116 = scmp.lt.s32.totalorder %s15, 3
      %p117 = pnand %p115, %p116
      %p118 = pneg %p117
      // Predicated region
      $region9: #{tpu_custom_call.1} parent=5 // pred_check
        _
      $region10: #{tpu_custom_call.1} parent=5 // pred_check_branch
        %120 = sbr.rel (%p117) target = $region12
      $region11: #{tpu_custom_call.1} parent=5 // pred_region
        %s121 = ssub.s32 %s15, 1
        // Predicated region
        $region13: #{tpu_custom_call.1} parent=11 // pred_check
          %p122 = pneg %p53
        $region14: #{tpu_custom_call.1} parent=11 // pred_check_branch
          %124 = sbr.rel (%p122) target = $region16
        $region15: #{tpu_custom_call.1} parent=11 // pred_region
          %s125 = smul.u32 16, %s24
          %s126 = ssub.s32 5, %s125
          %s127 = smul.u32 8, %s126
          %s128 = ssub.s32 128, %s127
          %s129 = sshll.u32 %s128, 4
          %130 = vsyncadd [#allocation3], %s129
          %p131 = scmp.ne.s32.totalorder 0, %s127
          %s132 = smul.addr %s125, 8
          %s133 = scalar_lea.hbm %s0, %s132
          %s134 = smul.u32 8, %s126
          %s135 = sshll.u32 %s133, 4
          %s136 = int_to_ptr.hbm [resolvable:$true] %s135
          %s137 = sshll.u32 [#allocation2], 4
          %s138 = int_to_ptr.vmem [resolvable:$true] %s137
          %s139 = sshll.u32 %s134, 4
          %143 = dma.hbm_to_vmem [thread:$0]  (%p131), %s136, %s139, %s138, [#allocation3], 128, 128, 8
        $region16: #{tpu_custom_call.1} parent=11 // pred_fallthru
          _
      $region12: #{tpu_custom_call.1} parent=5 // pred_fallthru
        _
      %p144 = scmp.lt.s32.totalorder %s15, 2
      // Predicated region
      $region17: #{tpu_custom_call.1} parent=5 // pred_check
        %p145 = pneg %p144
      $region18: #{tpu_custom_call.1} parent=5 // pred_check_branch
        %147 = sbr.rel (%p145) target = $region20
      $region19: #{tpu_custom_call.1} parent=5 // pred_region
        // Predicated region
        $region21: #{tpu_custom_call.1} parent=19 // pred_check
          %p148 = pneg %p73
        $region22: #{tpu_custom_call.1} parent=19 // pred_check_branch
          %150 = sbr.rel (%p148) target = $region24
        $region23: #{tpu_custom_call.1} parent=19 // pred_region
          %s151 = sand.u32 %s63, 1
          %s152 = scalar_lea.sflag [#allocation6], %s151
          %s153 = sand.u32 %s63, 1
          %s154 = smul.addr %s153, 36
          %s155 = scalar_lea.vmem [#allocation5], %s154
          %157 = vsyncadd %s152, 0
          %s158 = smul.addr %s23, 4
          %s159 = scalar_lea.hbm %s1, %s158
          %s160 = sshll.u32 %s159, 4
          %s161 = int_to_ptr.hbm [resolvable:$true] %s160
          %s162 = sshll.u32 %s155, 4
          %s163 = int_to_ptr.vmem [resolvable:$true] %s162
          %168 = dma.hbm_to_vmem [thread:$0]  %s161, 576, %s163, %s152, 128, 64, 4
        $region24: #{tpu_custom_call.1} parent=19 // pred_fallthru
          _
      $region20: #{tpu_custom_call.1} parent=5 // pred_fallthru
        _
      %p169 = scmp.le.s32.totalorder 1, %s15
      %p170 = scmp.lt.s32.totalorder %s15, 3
      %p171 = pnand %p169, %p170
      %p172 = pneg %p171
      // Predicated region
      $region25: #{tpu_custom_call.1} parent=5 // pred_check
        _
      $region26: #{tpu_custom_call.1} parent=5 // pred_check_branch
        %174 = sbr.rel (%p171) target = $region28
      $region27: #{tpu_custom_call.1} parent=5 // pred_region
        %s175 = ssub.s32 %s15, 1
        // Predicated region
        $region29: #{tpu_custom_call.1} parent=27 // pred_check
          %p176 = pneg %p53
        $region30: #{tpu_custom_call.1} parent=27 // pred_check_branch
          %178 = sbr.rel (%p176) target = $region32
        $region31: #{tpu_custom_call.1} parent=27 // pred_region
          %180 = dma.done [#allocation3], 2048
        $region32: #{tpu_custom_call.1} parent=27 // pred_fallthru
          _
        %s181 = sand.u32 %s66, 1
        %s182 = scalar_lea.sflag [#allocation6], %s181
        %s183 = sand.u32 %s66, 1
        %s184 = smul.addr %s183, 36
        %s185 = scalar_lea.vmem [#allocation5], %s184
        // Predicated region
        $region33: #{tpu_custom_call.1} parent=27 // pred_check
          %p186 = pneg %p79
        $region34: #{tpu_custom_call.1} parent=27 // pred_check_branch
          %188 = sbr.rel (%p186) target = $region36
        $region35: #{tpu_custom_call.1} parent=27 // pred_region
          %190 = dma.done %s182, 576
        $region36: #{tpu_custom_call.1} parent=27 // pred_fallthru
          _
        %p191 = pneg %p53
        %p192 = pneg %p50
        %s193 = sand.u32 %s66, 1
        %s194 = scalar_lea.sflag [#allocation6], %s193
        %s195 = sand.u32 %s66, 1
        %s196 = smul.addr %s195, 36
        %s197 = scalar_lea.vmem [#allocation5], %s196
        %p198 = pneg %p79
        %p199 = pneg %p76
        %p200 = pneg %p107
        %p201 = pneg %p104
        %s202 = sand.u32 %s94, 1
        %s203 = scalar_lea.sflag [#allocation4], %s202
        %s204 = sand.u32 %s94, 1
        %s205 = smul.addr %s204, 64
        %s206 = scalar_lea.vmem [#allocation7], %s205
        %s207 = smul.u32 16, %s24
        %s208 = ssub.s32 5, %s207
        %s209 = smul.u32 8, %s208
        %s210 = smul.u32 16, %s24
        %s211 = ssub.s32 5, %s210
        %s212 = smul.u32 4, %s211
        %v214 = vld [vmem:[#allocation2] sm:$0xff]
        %v215 = vld [vmem:[#allocation2 + $0x8] sm:$0xff]
        %v216 = vld [vmem:[#allocation2 + $0x10] sm:$0xff]
        %v217 = vld [vmem:[#allocation2 + $0x18] sm:$0xff]
        %v218 = vld [vmem:[#allocation2 + $0x20] sm:$0xff]
        %v219 = vld [vmem:[#allocation2 + $0x28] sm:$0xff]
        %v220 = vld [vmem:[#allocation2 + $0x30] sm:$0xff]
        %v221 = vld [vmem:[#allocation2 + $0x38] sm:$0xff]
        %v222 = vld [vmem:[#allocation2 + $0x40] sm:$0xff]
        %v223 = vld [vmem:[#allocation2 + $0x48] sm:$0xff]
        %v224 = vld [vmem:[#allocation2 + $0x50] sm:$0xff]
        %v225 = vld [vmem:[#allocation2 + $0x58] sm:$0xff]
        %v226 = vld [vmem:[#allocation2 + $0x60] sm:$0xff]
        %v227 = vld [vmem:[#allocation2 + $0x68] sm:$0xff]
        %v228 = vld [vmem:[#allocation2 + $0x70] sm:$0xff]
        %v229 = vld [vmem:[#allocation2 + $0x78] sm:$0xff]
        %v230 = vpack.c.bf16 %v215, %v214
        %v231 = vpack.c.bf16 %v217, %v216
        %v232 = vpack.c.bf16 %v219, %v218
        %v233 = vpack.c.bf16 %v221, %v220
        %v234 = vpack.c.bf16 %v223, %v222
        %v235 = vpack.c.bf16 %v225, %v224
        %v236 = vpack.c.bf16 %v227, %v226
        %v237 = vpack.c.bf16 %v229, %v228
        %v238 = vld [vmem:[%s185] sm:$0xf]
        %v239 = vld [vmem:[%s185 + $0x4] sm:$0xf]
        %v240 = vld [vmem:[%s185 + $0x8] sm:$0xf]
        %v241 = vld [vmem:[%s185 + $0xc] sm:$0xf]
        %v242 = vld [vmem:[%s185 + $0x10] sm:$0xf]
        %v243 = vld [vmem:[%s185 + $0x14] sm:$0xf]
        %v244 = vld [vmem:[%s185 + $0x18] sm:$0xf]
        %v245 = vld [vmem:[%s185 + $0x1c] sm:$0xf]
        %v246 = vld [vmem:[%s185 + $0x20] sm:$0xf]
        %v256 = vunpack.c.l.b16 %v238
        %v257 = vunpack.c.l.b16 %v239
        %v258 = vunpack.c.l.b16 %v240
        %v259 = vunpack.c.l.b16 %v241
        %v260 = vunpack.c.l.b16 %v242
        %v261 = vunpack.c.l.b16 %v243
        %v262 = vunpack.c.l.b16 %v244
        %v263 = vunpack.c.l.b16 %v245
        %v264 = vunpack.c.l.b16 %v246
        %v265 = vpack.c.b16 %v257, %v256
        %v266 = vpack.c.b16 %v259, %v258
        %v267 = vpack.c.b16 %v261, %v260
        %v268 = vpack.c.b16 %v263, %v262
        %v269 = vpack.c.b16 %v264, %v264
        %vm274 = vcmask 588800
        %v276 = vsel %vm274, %v230, 0
        %v279 = vsel %vm274, %v231, 0
        %v282 = vsel %vm274, %v232, 0
        %v285 = vsel %vm274, %v233, 0
        %v288 = vsel %vm274, %v234, 0
        %v291 = vsel %vm274, %v235, 0
        %v294 = vsel %vm274, %v236, 0
        %v297 = vsel %vm274, %v237, 0
        %vm299 = vcmask 1043456
        %v301 = vsel %vm299, %v269, 0
        %303 = vmatpush.bf16.msra.mxu0 0
        %304 = vmatpush.bf16.msra.mxu0 0
        %305 = vmatpush.bf16.msra.mxu0 0
        %306 = vmatpush.bf16.msra.mxu0 %v301
        %307 = vmatpush.bf16.msra.mxu0 %v268
        %308 = vmatpush.bf16.msra.mxu0 %v267
        %309 = vmatpush.bf16.msra.mxu0 %v266
        %310 = vmatpush.bf16.msra.mxu0 %v265
        %311 = vmatmul.bf16.gmra.mxu0 %v276
        %v312 = vpop.f32.mrf.mxu0
        %v313 = vadd.f32 0.0, %v312
        %v314 = vpop.f32.mrf.mxu0
        %v315 = vadd.f32 0.0, %v314
        %316 = vmatmul.bf16.gmra.mxu0 %v279
        %v317 = vpop.f32.mrf.mxu0
        %v318 = vadd.f32 0.0, %v317
        %v319 = vpop.f32.mrf.mxu0
        %v320 = vadd.f32 0.0, %v319
        %321 = vmatmul.bf16.gmra.mxu0 %v282
        %v322 = vpop.f32.mrf.mxu0
        %v323 = vadd.f32 0.0, %v322
        %v324 = vpop.f32.mrf.mxu0
        %v325 = vadd.f32 0.0, %v324
        %326 = vmatmul.bf16.gmra.mxu0 %v285
        %v327 = vpop.f32.mrf.mxu0
        %v328 = vadd.f32 0.0, %v327
        %v329 = vpop.f32.mrf.mxu0
        %v330 = vadd.f32 0.0, %v329
        %331 = vmatmul.bf16.gmra.mxu0 %v288
        %v332 = vpop.f32.mrf.mxu0
        %v333 = vadd.f32 0.0, %v332
        %v334 = vpop.f32.mrf.mxu0
        %v335 = vadd.f32 0.0, %v334
        %336 = vmatmul.bf16.gmra.mxu0 %v291
        %v337 = vpop.f32.mrf.mxu0
        %v338 = vadd.f32 0.0, %v337
        %v339 = vpop.f32.mrf.mxu0
        %v340 = vadd.f32 0.0, %v339
        %341 = vmatmul.bf16.gmra.mxu0 %v294
        %v342 = vpop.f32.mrf.mxu0
        %v343 = vadd.f32 0.0, %v342
        %v344 = vpop.f32.mrf.mxu0
        %v345 = vadd.f32 0.0, %v344
        %346 = vmatmul.bf16.gmra.mxu0 %v297
        %v347 = vpop.f32.mrf.mxu0
        %v348 = vadd.f32 0.0, %v347
        %v349 = vpop.f32.mrf.mxu0
        %v350 = vadd.f32 0.0, %v349
        %351 = vdwg.mxu0
        %v352 = vpack.c.bf16 %v313, %v313
        %v353 = vpack.c.bf16 %v315, %v315
        %v354 = vpack.c.bf16 %v318, %v318
        %v355 = vpack.c.bf16 %v320, %v320
        %v356 = vpack.c.bf16 %v323, %v323
        %v357 = vpack.c.bf16 %v325, %v325
        %v358 = vpack.c.bf16 %v328, %v328
        %v359 = vpack.c.bf16 %v330, %v330
        %v360 = vpack.c.bf16 %v333, %v333
        %v361 = vpack.c.bf16 %v335, %v335
        %v362 = vpack.c.bf16 %v338, %v338
        %v363 = vpack.c.bf16 %v340, %v340
        %v364 = vpack.c.bf16 %v343, %v343
        %v365 = vpack.c.bf16 %v345, %v345
        %v366 = vpack.c.bf16 %v348, %v348
        %v367 = vpack.c.bf16 %v350, %v350
        %368 = vst [vmem:[%s206] sm:$0xf] %v352
        %369 = vst [vmem:[%s206 + $0x4] sm:$0xf] %v353
        %370 = vst [vmem:[%s206 + $0x8] sm:$0xf] %v354
        %371 = vst [vmem:[%s206 + $0xc] sm:$0xf] %v355
        %372 = vst [vmem:[%s206 + $0x10] sm:$0xf] %v356
        %373 = vst [vmem:[%s206 + $0x14] sm:$0xf] %v357
        %374 = vst [vmem:[%s206 + $0x18] sm:$0xf] %v358
        %375 = vst [vmem:[%s206 + $0x1c] sm:$0xf] %v359
        %376 = vst [vmem:[%s206 + $0x20] sm:$0xf] %v360
        %377 = vst [vmem:[%s206 + $0x24] sm:$0xf] %v361
        %378 = vst [vmem:[%s206 + $0x28] sm:$0xf] %v362
        %379 = vst [vmem:[%s206 + $0x2c] sm:$0xf] %v363
        %380 = vst [vmem:[%s206 + $0x30] sm:$0xf] %v364
        %381 = vst [vmem:[%s206 + $0x34] sm:$0xf] %v365
        %382 = vst [vmem:[%s206 + $0x38] sm:$0xf] %v366
        %383 = vst [vmem:[%s206 + $0x3c] sm:$0xf] %v367
        %s384 = sand.u32 %s94, 1
        %s385 = scalar_lea.sflag [#allocation4], %s384
        %s386 = sand.u32 %s94, 1
        %s387 = smul.addr %s386, 64
        %s388 = scalar_lea.vmem [#allocation7], %s387
        // Predicated region
        $region37: #{tpu_custom_call.1} parent=27 // pred_check
          %p389 = pneg %p104
        $region38: #{tpu_custom_call.1} parent=27 // pred_check_branch
          %391 = sbr.rel (%p389) target = $region40
        $region39: #{tpu_custom_call.1} parent=27 // pred_region
          %s392 = smul.u32 16, %s24
          %s393 = ssub.s32 5, %s392
          %s394 = smul.u32 4, %s393
          %s395 = ssub.s32 64, %s394
          %s396 = sshll.u32 %s395, 4
          %397 = vsyncadd %s385, %s396
          %p398 = scmp.ne.s32.totalorder 0, %s394
          %s399 = smul.addr %s392, 2
          %s400 = sadd.s32 %s25, %s399
          %s401 = smul.addr %s400, 4
          %s402 = scalar_lea.hbm %s2, %s401
          %s403 = smul.u32 4, %s393
          %s404 = sshll.u32 %s388, 4
          %s405 = int_to_ptr.vmem [resolvable:$true] %s404
          %s406 = sshll.u32 %s402, 4
          %s407 = int_to_ptr.hbm [resolvable:$true] %s406
          %s408 = sshll.u32 %s403, 4
          %412 = dma.vmem_to_hbm [thread:$0]  (%p398), %s405, %s408, %s407, %s385, 64, 128, 4
        $region40: #{tpu_custom_call.1} parent=27 // pred_fallthru
          _
      $region28: #{tpu_custom_call.1} parent=5 // pred_fallthru
        _
      %p413 = scmp.le.s32.totalorder 2, %s15
      // Predicated region
      $region41: #{tpu_custom_call.1} parent=5 // pred_check
        %p414 = pneg %p413
      $region42: #{tpu_custom_call.1} parent=5 // pred_check_branch
        %416 = sbr.rel (%p414) target = $region44
      $region43: #{tpu_custom_call.1} parent=5 // pred_region
        %s417 = ssub.s32 %s15, 2
        // Predicated region
        $region45: #{tpu_custom_call.1} parent=43 // pred_check
          %p418 = pneg %p110
        $region46: #{tpu_custom_call.1} parent=43 // pred_check_branch
          %420 = sbr.rel (%p418) target = $region48
        $region47: #{tpu_custom_call.1} parent=43 // pred_region
          %s421 = sand.u32 %s95, 1
          %s422 = scalar_lea.sflag [#allocation4], %s421
          %s423 = sand.u32 %s95, 1
          %s424 = smul.addr %s423, 64
          %s425 = scalar_lea.vmem [#allocation7], %s424
          %427 = dma.done %s422, 1024
        $region48: #{tpu_custom_call.1} parent=43 // pred_fallthru
          _
      $region44: #{tpu_custom_call.1} parent=5 // pred_fallthru
        _
    $region6: #{tpu_custom_call.1} parent=1 // loop_footer
      %s19 = sadd.s32 1, %s15
    $region7: #{tpu_custom_call.1} parent=1 // loop_footer_branch
      %14 = sbr.rel target = $region3
    $region8: #{tpu_custom_call.1} parent=1 // loop_exit
      _
    %428 = vsyncpa [#allocation3], 1
    %s429 = scalar_lea.sflag [#allocation3], 1
    %430 = vsyncpa %s429, 1
    %431 = vsyncpa [#allocation6], 1
    %s432 = scalar_lea.sflag [#allocation6], 1
    %433 = vsyncpa %s432, 1
    %434 = vsyncpa [#allocation4], 1
    %s435 = scalar_lea.sflag [#allocation4], 1
    %436 = vsyncpa %s435, 1

</llo_original>
